<compile_context>
chip_gen: v6e
topology: v6e:2x2x1
jax: 0.10.0
libtpu: 0.0.40
codegen_flags: <defaults>
</compile_context>

<pallas_src>
import functools

import numpy as np
import jax
import jax.numpy as jnp
from jax import lax
from jax.experimental import pallas as pl
from jax.experimental.pallas import tpu as pltpu


def _round_up(a, b):
    return (a + b - 1) // b * b


# ----------------------------------------------------------------------------
# Kernel 1a: per-window node masks (tiny, single grid step)
# ----------------------------------------------------------------------------
def node_mask_kernel(time_ref, nmask_ref, *, seq_len, stride, num_windows):
    # time_ref: (1, Np) int32 ; nmask_ref: (W, Np) int8
    starts = 1 + stride * lax.broadcasted_iota(
        jnp.int32, (num_windows, 1), 0)                        # (W, 1)
    ends = starts + seq_len
    t = time_ref[...]                                          # (1, Np)
    nmask_ref[...] = ((starts <= t) & (t < ends)).astype(jnp.int8)


# ----------------------------------------------------------------------------
# Kernel 1b: per-window edge masks, tiled (parallel) over E
# ----------------------------------------------------------------------------
def edge_mask_kernel(tsrc_ref, tdst_ref, emask_ref, *, seq_len, stride,
                     num_windows):
    # tsrc_ref / tdst_ref: (1, TILE_E) int32 ; emask_ref: (W, TILE_E) int8
    starts = 1 + stride * lax.broadcasted_iota(
        jnp.int32, (num_windows, 1), 0)                        # (W, 1)
    ends = starts + seq_len
    ts = tsrc_ref[...]
    td = tdst_ref[...]
    edge_in = ((starts <= ts) & (ts < ends) &
               (starts <= td) & (td < ends))                   # (W, TILE_E)
    emask_ref[...] = edge_in.astype(jnp.int8)


# ----------------------------------------------------------------------------
# Kernel 2: per-window compacting gather via one-hot MXU matmul
# ----------------------------------------------------------------------------
def gather_kernel(dest_ref, src_ref, out_ref):
    # dest_ref: (1, 1, Np) int32  — dest[j] = output row of node j, -1 if unused
    # src_ref : (Np, TILE_F) f32  — packed [x | pos | y | time] slab chunk
    # out_ref : (1, Nr, TILE_F) f32
    # TODO(synk): for very large N (Np beyond a few thousand) tile the one-hot
    #             over 128/256-row output chunks instead of one (Nr, Np) pass.
    d = dest_ref[0]                                            # (1, Np)
    n_rows = out_ref.shape[1]                                  # Nr
    iota = lax.broadcasted_iota(jnp.int32, (n_rows, d.shape[-1]), 0)
    onehot = (iota == d).astype(jnp.float32)                   # (Nr, Np)
    out_ref[0] = jnp.dot(onehot, src_ref[...],
                         preferred_element_type=jnp.float32)


# ----------------------------------------------------------------------------
# Wrapper
# ----------------------------------------------------------------------------
def temporal_pooling_pallas(x, y, pos, time, edge_index_t, edge_attr_t,
                            seq_len, stride):
    N, F = x.shape
    P = pos.shape[1]
    E = edge_index_t.shape[1]

    time = time.astype(jnp.int32)
    time_np = np.asarray(time)
    max_n_frames = int(time_np.max())
    assert max_n_frames < (1 << 24)     # time must round-trip exactly via f32
    W = len(range(1, max_n_frames, stride))
    if W == 0:
        return []

    # ---- padded extents ----------------------------------------------------
    Np = _round_up(N, 128)              # lane dim for masks / slab rows (MXU K)
    Nr = _round_up(N, 8)                # sublane-only pad for gather output
    Ep = _round_up(max(E, 1), 128)
    TILE_E = min(Ep, 2048)
    Ep = _round_up(Ep, TILE_E)
    C = F + P + 2                       # packed columns: x | pos | y | time
    Fp = _round_up(C, 128)
    if Fp <= 512:
        TILE_F = Fp
    else:
        TILE_F = 512 if Fp % 512 == 0 else (256 if Fp % 256 == 0 else 128)

    src = edge_index_t[0].astype(jnp.int32)
    dst = edge_index_t[1].astype(jnp.int32)

    # Sentinel time 0 never lands in a window (window starts are >= 1).
    time2d = jnp.zeros((1, Np), jnp.int32).at[0, :N].set(time)
    tsrc2d = jnp.zeros((1, Ep), jnp.int32).at[0, :E].set(time[src])
    tdst2d = jnp.zeros((1, Ep), jnp.int32).at[0, :E].set(time[dst])

    # ---- Kernel 1a: node masks --------------------------------------------
    node_mask = pl.pallas_call(
        functools.partial(node_mask_kernel,
                          seq_len=seq_len, stride=stride, num_windows=W),
        out_shape=jax.ShapeDtypeStruct((W, Np), jnp.int8),
        grid=(1,),
        in_specs=[pl.BlockSpec((1, Np), lambda i: (0, 0))],
        out_specs=pl.BlockSpec((W, Np), lambda i: (0, 0)),
        compiler_params=pltpu.CompilerParams(
            dimension_semantics=("arbitrary",)),
    )(time2d)

    # ---- Kernel 1b: edge masks (E axis parallel across TCs) ----------------
    edge_mask = pl.pallas_call(
        functools.partial(edge_mask_kernel,
                          seq_len=seq_len, stride=stride, num_windows=W),
        out_shape=jax.ShapeDtypeStruct((W, Ep), jnp.int8),
        grid=(Ep // TILE_E,),
        in_specs=[pl.BlockSpec((1, TILE_E), lambda e: (0, e)),
                  pl.BlockSpec((1, TILE_E), lambda e: (0, e))],
        out_specs=pl.BlockSpec((W, TILE_E), lambda e: (0, e)),
        compiler_params=pltpu.CompilerParams(
            dimension_semantics=("parallel",)),
    )(tsrc2d, tdst2d)

    # ---- counts + per-window destination rows (cheap XLA, no SMEM table) ---
    m32 = node_mask.astype(jnp.int32)                         # (W, Np)
    counts = jnp.sum(m32, axis=1)                             # (W,)
    dest = jnp.where(m32 > 0, jnp.cumsum(m32, axis=1) - 1, -1).astype(jnp.int32)
    dest3d = dest.reshape(W, 1, Np)                           # (W, 1, Np)

    # ---- packed lane-dense node feature slab (rows = Np, MXU-aligned K) ----
    packed = jnp.concatenate(
        [x.astype(jnp.float32),
         pos.astype(jnp.float32),
         y.astype(jnp.float32)[:, None],
         time.astype(jnp.float32)[:, None]], axis=1)          # (N, C)
    packed = jnp.pad(packed, ((0, Np - N), (0, Fp - C)))       # (Np, Fp)

    # ---- Kernel 2: per-window one-hot MXU gather ----------------------------
    gather_vmem = (2 * Np * TILE_F * 4        # slab chunk, double-buffered
                   + 2 * Nr * TILE_F * 4      # output block, double-buffered
                   + 2 * Np * 4               # dest row, double-buffered
                   + Nr * Np * 4              # one-hot intermediate
                   + (4 << 20))               # headroom for Mosaic internals
    gather_vmem = int(min(max(gather_vmem, 16 << 20), 64 << 20))

    gathered = pl.pallas_call(
        gather_kernel,
        out_shape=jax.ShapeDtypeStruct((W, Nr, Fp), jnp.float32),
        grid=(W, Fp // TILE_F),
        in_specs=[pl.BlockSpec((1, 1, Np), lambda w, f: (w, 0, 0)),
                  pl.BlockSpec((Np, TILE_F), lambda w, f: (0, f))],
        out_specs=pl.BlockSpec((1, Nr, TILE_F), lambda w, f: (w, 0, f)),
        compiler_params=pltpu.CompilerParams(
            dimension_semantics=("parallel", "parallel"),
            vmem_limit_bytes=gather_vmem),
    )(dest3d, packed)
    jax.block_until_ready(gathered)

    # ---- host-side compaction into variable-length pooled graphs -----------
    # TODO(synk): dynamically sized per-window graphs (like the PyTorch list
    #             construction) have no fixed-shape device equivalent.
    nmask_np = np.asarray(node_mask)[:, :N].astype(bool)
    emask_np = np.asarray(edge_mask)[:, :E].astype(bool)
    cnt_np = np.asarray(counts)
    g_np = np.asarray(gathered)                               # (W, Nr, Fp)
    src_np = np.asarray(src)
    dst_np = np.asarray(dst)
    ea_np = np.asarray(edge_attr_t)
    x_dt = np.asarray(x).dtype
    y_dt = np.asarray(y).dtype
    pos_dt = np.asarray(pos).dtype
    t_dt = time_np.dtype

    newid = np.cumsum(nmask_np, axis=1) - 1                   # relabel per window

    data_list = []
    for w in range(W):
        c = int(cnt_np[w])
        ekeep = emask_np[w]
        edge_index = np.stack([newid[w, src_np[ekeep]],
                               newid[w, dst_np[ekeep]]], axis=0)
        rows = g_np[w, :c]
        data_list.append(dict(
            x=rows[:, :F].astype(x_dt),
            y=rows[:, F + P].astype(y_dt),
            pos=rows[:, F:F + P].astype(pos_dt),
            time=np.rint(rows[:, F + P + 1]).astype(t_dt),
            edge_index_t=edge_index,
            edge_attr_t=ea_np[ekeep],
        ))
    return data_list


# ----------------------------------------------------------------------------
# NumPy reference reproducing the PyTorch module semantics
# ----------------------------------------------------------------------------
def temporal_pooling_reference(x, y, pos, time, edge_index_t, edge_attr_t,
                               seq_len, stride):
    x, y, pos = np.asarray(x), np.asarray(y), np.asarray(pos)
    time = np.asarray(time)
    src, dst = np.asarray(edge_index_t)
    ea = np.asarray(edge_attr_t)
    max_n_frames = int(np.max(time))
    out = []
    for start in range(1, max_n_frames, stride):
        end = start + seq_len
        node_index = np.where((start <= time) & (time < end))[0]
        sel = np.zeros(time.shape[0], dtype=bool)
        sel[node_index] = True
        newid = np.cumsum(sel) - 1
        ekeep = sel[src] & sel[dst]          # FilterEdges: both endpoints selected
        edge_index = np.stack([newid[src[ekeep]], newid[dst[ekeep]]], axis=0)
        out.append(dict(x=x[node_index], y=y[node_index], pos=pos[node_index],
                        time=time[node_index], edge_index_t=edge_index,
                        edge_attr_t=ea[ekeep]))
    return out


if __name__ == "__main__":
    key = jax.random.PRNGKey(0)
    k1, k2, k3, k4, k5, k6, k7 = jax.random.split(key, 7)

    N, F, P, E, A = 16, 32, 3, 24, 4
    seq_len, stride = 4, 2

    x = jax.random.normal(k1, (N, F), jnp.float32)
    y = jax.random.normal(k2, (N,), jnp.float32)
    pos = jax.random.normal(k3, (N, P), jnp.float32)
    time = jax.random.randint(k4, (N,), 1, 11, jnp.int32)
    time = time.at[0].set(10)                # guarantee a non-trivial max frame
    src = jax.random.randint(k5, (E,), 0, N, jnp.int32)
    dst = jax.random.randint(k6, (E,), 0, N, jnp.int32)
    edge_index_t = jnp.stack([src, dst])
    edge_attr_t = jax.random.normal(k7, (E, A), jnp.float32)

    got = temporal_pooling_pallas(x, y, pos, time, edge_index_t, edge_attr_t,
                                  seq_len, stride)
    ref = temporal_pooling_reference(x, y, pos, time, edge_index_t, edge_attr_t,
                                     seq_len, stride)

    assert len(got) == len(ref)
    for g, r in zip(got, ref):
        np.testing.assert_allclose(g["x"], r["x"], rtol=1e-6, atol=1e-6)
        np.testing.assert_allclose(g["y"], r["y"], rtol=1e-6, atol=1e-6)
        np.testing.assert_allclose(g["pos"], r["pos"], rtol=1e-6, atol=1e-6)
        np.testing.assert_array_equal(g["time"], r["time"])
        np.testing.assert_array_equal(g["edge_index_t"], r["edge_index_t"])
        np.testing.assert_allclose(g["edge_attr_t"], r["edge_attr_t"],
                                   rtol=1e-6, atol=1e-6)

    print("KERNEL_OK")
</pallas_src>

<mosaic_0001>
module attributes {stable_mosaic.version = 11 : i64} {
  func.func @node_mask_kernel(%arg0: i32, %arg1: memref<1x128xi32, #tpu.memory_space<vmem>>, %arg2: memref<5x128xi8, #tpu.memory_space<vmem>>) attributes {dimension_semantics = [#tpu.dimension_semantics<arbitrary>], iteration_bounds = array<i64: 1>, scalar_prefetch = 0 : i64, scratch_operands = 0 : i64, tpu.core_type = #tpu.core_type<tc>, window_params = [{pipeline_mode = #tpu.pipeline_mode<synchronous>, transform_indices = @transform_0, window_bounds = array<i64: 1, 128>}, {pipeline_mode = #tpu.pipeline_mode<synchronous>, transform_indices = @transform_1, window_bounds = array<i64: 5, 128>}]} {
    %0 = tpu.iota {dimensions = array<i32: 0>} : vector<5x1xi32>
    %c2_i32 = arith.constant 2 : i32
    %1 = vector.broadcast %c2_i32 : i32 to vector<5x1xi32>
    %2 = arith.muli %1, %0 : vector<5x1xi32>
    %c1_i32 = arith.constant 1 : i32
    %3 = vector.broadcast %c1_i32 : i32 to vector<5x1xi32>
    %4 = arith.addi %3, %2 : vector<5x1xi32>
    %c4_i32 = arith.constant 4 : i32
    %5 = vector.broadcast %c4_i32 : i32 to vector<5x1xi32>
    %6 = arith.addi %4, %5 : vector<5x1xi32>
    %c0 = arith.constant 0 : index
    %c0_0 = arith.constant 0 : index
    %7 = vector.load %arg1[%c0, %c0_0] : memref<1x128xi32, #tpu.memory_space<vmem>>, vector<1x128xi32>
    %8 = vector.broadcast %4 : vector<5x1xi32> to vector<5x128xi32>
    %9 = vector.broadcast %7 : vector<1x128xi32> to vector<5x128xi32>
    %10 = arith.cmpi sle, %8, %9 : vector<5x128xi32>
    %11 = vector.broadcast %7 : vector<1x128xi32> to vector<5x128xi32>
    %12 = vector.broadcast %6 : vector<5x1xi32> to vector<5x128xi32>
    %13 = arith.cmpi slt, %11, %12 : vector<5x128xi32>
    %14 = arith.andi %10, %13 : vector<5x128xi1>
    %15 = arith.extui %14 : vector<5x128xi1> to vector<5x128xi8>
    %c0_1 = arith.constant 0 : index
    %c0_2 = arith.constant 0 : index
    %16 = vector.load %arg2[%c0_1, %c0_2] : memref<5x128xi8, #tpu.memory_space<vmem>>, vector<5x128xi8>
    tpu.vector_store %arg2[%c0_1, %c0_2], %15 {strides = array<i32>} : memref<5x128xi8, #tpu.memory_space<vmem>>, vector<5x128xi8>,
    return
  }
  func.func @transform_0(%arg0: i32) -> (i32, i32) {
    %c0_i32 = arith.constant 0 : i32
    %c0_i32_0 = arith.constant 0 : i32
    %c0_i32_1 = arith.constant 0 : i32
    return %c0_i32, %c0_i32_0 : i32, i32
  }
  func.func @transform_1(%arg0: i32) -> (i32, i32) {
    %c0_i32 = arith.constant 0 : i32
    %c0_i32_0 = arith.constant 0 : i32
    %c0_i32_1 = arith.constant 0 : i32
    return %c0_i32, %c0_i32_0 : i32, i32
  }
}

</mosaic_0001>

<llo_original>
// kernel: tpu_custom_call.1
$region0: #{tpu_custom_call.1}
  #allocation0 [shape = 'u32[]', space=smem, size = 0x4, offset = 0x4, fixed_abs, tag = 'smem constant byte address 0x4 - core index']
  #allocation1 [shape = 'u32[144,128]{1,0:T(1,128)}', space=vmem, size = 0x12000, scoped, tag = 'internal scratch']
  %s0 = inlined_call_operand.hbm [shape: s32[1,128], index: 0, kind: input, shape index: {}]
  %s1 = inlined_call_operand.hbm [shape: s8[5,128], index: 1, kind: output, shape index: {}]
  %s2 = sld [smem:[#allocation0]]
  $region18: #{tpu_custom_call.1} parent=0
    _
  %s4 = ssub.s32 1, %s2
  %s5 = scalar_select 0, %s4, %s2
  $region1: #{tpu_custom_call.1} parent=0
    #allocation2 [shape = 'u8[512]{0}', space=vmem, size = 0x400, scoped, tag = 'input window, operand 0, single buffered']
    #allocation3 [shape = 's32[1]{0}', space=sflag, size = 0x4, scoped, tag = 'scoped memory for tpu_custom_call.1']
    #allocation4 [shape = 's32[1]{0}', space=sflag, size = 0x4, scoped, tag = 'scoped memory for tpu_custom_call.1']
    #allocation5 [shape = 'u8[1024]{0}', space=vmem, size = 0x400, scoped, tag = 'output window, operand 0, single buffered']
    %6 = vsyncpa [#allocation3], 0
    %7 = vsyncpa [#allocation4], 0
    // Predicated region
    $region2: #{tpu_custom_call.1} parent=1 // pred_check
      _
    $region3: #{tpu_custom_call.1} parent=1 // pred_check_branch
      %9 = sbr.rel (0) target = $region5
    $region4: #{tpu_custom_call.1} parent=1 // pred_region
      %s11 = ssub.s32 16, 16
      %12 = vsyncadd [#allocation3], %s11
      %s14 = sshll.u32 [#allocation2], 4
      %s15 = int_to_ptr.vmem [resolvable:$true] %s14
      %17 = dma.hbm_to_vmem [thread:$0]  %s0, 16, %s15, [#allocation3]
    $region5: #{tpu_custom_call.1} parent=1 // pred_fallthru
      _
    // Predicated region
    $region6: #{tpu_custom_call.1} parent=1 // pred_check
      _
    $region7: #{tpu_custom_call.1} parent=1 // pred_check_branch
      %19 = sbr.rel (0) target = $region9
    $region8: #{tpu_custom_call.1} parent=1 // pred_region
      %20 = dma.done [#allocation3], 16
    $region9: #{tpu_custom_call.1} parent=1 // pred_fallthru
      _
    %v23 = vlaneseq
    %v24 = vshrl.u32 %v23, 7
    %v25 = vmul.u32 %v24, 2
    %v26 = vadd.s32 %v25, 1
    %v27 = vadd.s32 %v26, 4
    %v28 = vld [vmem:[#allocation2] sm:$0x1]
    %v29 = vlaneseq
    %v30 = vshrl.u32 %v29, 7
    %v31 = vsub.s32 0, %v30
    %v32 = vrot.slane %v28, %v31
    %vm33 = vcmp.le.s32.totalorder %v26, %v32
    %vm34 = vcmp.lt.s32.totalorder %v32, %v27
    %vm35 = vmand %vm33, %vm34
    %vm36 = vmpackc.low %vm35, %vm35
    %vm37 = vmpackc.even %vm36, %vm36
    %v38 = vsel %vm37, 16843009, 0
    %vm39 = vcmask 1041408
    %vm40 = vsmask.f32 1024
    %vm41 = vmand %vm39, %vm40
    %v42 = vld [vmem:[#allocation5] sm:$0x3]
    %v43 = vsel %vm41, %v38, %v42
    %44 = vst [vmem:[#allocation5] sm:$0x3] %v43
    // Predicated region
    $region10: #{tpu_custom_call.1} parent=1 // pred_check
      _
    $region11: #{tpu_custom_call.1} parent=1 // pred_check_branch
      %46 = sbr.rel (0) target = $region13
    $region12: #{tpu_custom_call.1} parent=1 // pred_region
      %s48 = ssub.s32 32, 32
      %49 = vsyncadd [#allocation4], %s48
      %s51 = sshll.u32 [#allocation5], 4
      %s52 = int_to_ptr.vmem [resolvable:$true] %s51
      %54 = dma.vmem_to_hbm [thread:$0]  %s52, 32, %s1, [#allocation4]
    $region13: #{tpu_custom_call.1} parent=1 // pred_fallthru
      _
    // Predicated region
    $region14: #{tpu_custom_call.1} parent=1 // pred_check
      _
    $region15: #{tpu_custom_call.1} parent=1 // pred_check_branch
      %56 = sbr.rel (0) target = $region17
    $region16: #{tpu_custom_call.1} parent=1 // pred_region
      %57 = dma.done [#allocation4], 32
    $region17: #{tpu_custom_call.1} parent=1 // pred_fallthru
      _
    %58 = vsyncpa [#allocation3], 1
    %59 = vsyncpa [#allocation4], 1

</llo_original>
